<compile_context>
chip_gen: v5e
topology: v5e:2x2
jax: 0.10.0
libtpu: 0.0.40
codegen_flags: <defaults>
</compile_context>

<pallas_src>
import math
import jax
import jax.numpy as jnp
from jax.experimental import pallas as pl
from jax.experimental.pallas import tpu as pltpu


def tn_fused_kernel(enc_ref, lens_ref, m0_ref, whh_w_ref, whh_b_ref,
                    wih_we_ref, wih_be_ref, gsum_ref, fc_w_ref, fc_b_ref,
                    out_ref, m_ref):
    """One grid step = one recurrence step. Carried state lives in m_ref."""
    s = pl.program_id(0)

    @pl.when(s == 0)
    def _():
        m_ref[...] = m0_ref[...]

    m = m_ref[...]                                                   # (B, R)

    # State-independent matmul for this step (MXU): w2 = whh(enc_s), flat (B, R^2).
    # TODO(synk): at real sizes, stream enc/whh in bf16 (f32 accumulation) to
    # halve HBM bytes and hit the native bf16 MXU path on v6e/v7x.
    w2 = (jnp.dot(enc_ref[0], whh_w_ref[...],
                  preferred_element_type=jnp.float32) + whh_b_ref[...])

    # State-dependent matmul (MXU) with the j -> (j,k) lane expansion already
    # folded into the weights:  w1e[b, j*R + k] = wih(m)[b, j].
    w1e = (jnp.dot(m, wih_we_ref[...],
                   preferred_element_type=jnp.float32) + wih_be_ref[...])

    # einsum('bij,bjk->bik') done lane-dense: elementwise mul on (B, R^2) plus
    # an MXU group-sum over j (gsum[c,k] = 1 iff c % R == k).
    h = jnp.tanh(jnp.dot(w1e * w2, gsum_ref[...],
                         preferred_element_type=jnp.float32))        # (B, R)

    # Sequence-length masking: single vselect, carries old state on padding.
    m_ref[...] = jnp.where(s < lens_ref[...], h, m)

    # Classifier head written exactly once, on the final step.
    @pl.when(s == pl.num_programs(0) - 1)
    def _():
        out_ref[...] = (jnp.dot(m_ref[...], fc_w_ref[...],
                                preferred_element_type=jnp.float32)
                        + fc_b_ref[...])


def tn_model_forward(x_ids, lens, params):
    """Embedding gather (plain JAX) + one fused pallas_call over the S grid."""
    emb = params["embedding"]                                        # (V, R^2)
    # Time-major gather: transpose the tiny int index array, so the (S, B, R^2)
    # encoding is produced directly — no materialized transpose of activations.
    # TODO(synk): fuse this gather into the kernel via scalar-prefetched x_ids
    # + pl.Element row gather once shapes justify it.
    enc_tm = jnp.take(emb, x_ids.T.astype(jnp.int32), axis=0)        # (S, B, R^2)
    S, B, R2 = enc_tm.shape
    R = int(round(math.sqrt(R2)))
    O = params["fc_b"].shape[-1]

    # Fold the lane expansion into the wih weights (done once, outside the loop).
    wih_w_exp = jnp.repeat(params["wih_w"], R, axis=1)               # (R, R^2)
    wih_b_exp = jnp.repeat(params["wih_b"], R, axis=1)               # (1, R^2)
    # Constant group-sum matrix turning the j-contraction into an MXU matmul.
    gsum = (jnp.arange(R2)[:, None] % R ==
            jnp.arange(R)[None, :]).astype(jnp.float32)              # (R^2, R)

    lens2d = lens.astype(jnp.int32).reshape(B, 1)
    const2 = lambda s: (0, 0)

    grid_spec = pltpu.PrefetchScalarGridSpec(
        num_scalar_prefetch=0,
        grid=(S,),
        in_specs=[
            pl.BlockSpec((1, B, R2), lambda s: (s, 0, 0)),   # enc: one step / iter
            pl.BlockSpec((B, 1), const2),                    # lens
            pl.BlockSpec((B, R), const2),                    # m0
            pl.BlockSpec((R2, R2), const2),                  # whh_w (resident)
            pl.BlockSpec((1, R2), const2),                   # whh_b
            pl.BlockSpec((R, R2), const2),                   # wih_w (expanded)
            pl.BlockSpec((1, R2), const2),                   # wih_b (expanded)
            pl.BlockSpec((R2, R), const2),                   # gsum
            pl.BlockSpec((R, O), const2),                    # fc_w
            pl.BlockSpec((1, O), const2),                    # fc_b
        ],
        out_specs=pl.BlockSpec((B, O), const2),
        scratch_shapes=[pltpu.VMEM((B, R), jnp.float32)],    # carried hidden state
    )

    # TODO(synk): for large B on v7x, add a batch-tile grid axis marked
    # "parallel" (per-tile m scratch) to split work across the two TensorCores.
    return pl.pallas_call(
        tn_fused_kernel,
        out_shape=jax.ShapeDtypeStruct((B, O), jnp.float32),
        grid_spec=grid_spec,
        compiler_params=pltpu.CompilerParams(
            dimension_semantics=("arbitrary",),   # S is a sequential recurrence
            vmem_limit_bytes=32 * 1024 * 1024,
        ),
    )(enc_tm.astype(jnp.float32), lens2d, params["m0"],
      params["whh_w"], params["whh_b"], wih_w_exp, wih_b_exp, gsum,
      params["fc_w"], params["fc_b"])


def tn_model_reference(x_ids, lens, params):
    """Pure-JAX reference mirroring the PyTorch forward (for validation)."""
    hp = jax.lax.Precision.HIGHEST
    emb = params["embedding"]
    enc = emb[x_ids]                                                 # (B, S, R^2)
    B, S, R2 = enc.shape
    R = int(round(math.sqrt(R2)))
    m = params["m0"]                                                 # (B, R)
    for i in range(S):
        w1 = jnp.dot(m, params["wih_w"], precision=hp) + params["wih_b"]
        w2 = (jnp.dot(enc[:, i, :], params["whh_w"], precision=hp)
              + params["whh_b"]).reshape(B, R, R)
        h = jnp.tanh(jnp.einsum("bj,bjk->bk", w1, w2, precision=hp))
        keep = (i < lens).astype(jnp.float32)[:, None]
        m = h * keep + m * (1.0 - keep)
    return jnp.dot(m, params["fc_w"], precision=hp) + params["fc_b"]


def init_params(key, rank, vocab_size, output_size, batch_size):
    """Deterministic synthetic parameters matching the PyTorch module shapes."""
    r2 = rank * rank
    keys = jax.random.split(key, 8)

    def linear_init(kw, kb, fan_in, fan_out):
        bound = 1.0 / math.sqrt(fan_in)
        w = jax.random.uniform(kw, (fan_in, fan_out), jnp.float32, -bound, bound)
        b = jax.random.uniform(kb, (1, fan_out), jnp.float32, -bound, bound)
        return w, b

    wih_w, wih_b = linear_init(keys[0], keys[1], rank, rank)          # Linear(rank, rank)
    whh_w, whh_b = linear_init(keys[2], keys[3], r2, r2)              # Linear(r^2, r^2)
    fc_w, fc_b = linear_init(keys[4], keys[5], rank, output_size)     # Linear(rank, out)

    # nn.Embedding(vocab, r^2, padding_idx=0): N(0,1) init, row 0 zeroed
    embedding = jax.random.normal(keys[6], (vocab_size, r2), jnp.float32)
    embedding = embedding.at[0].set(0.0)

    # TN.init_m1: kaiming_uniform_ on (B, 1, rank); bound = sqrt(2)*sqrt(3/rank)
    m_bound = math.sqrt(2.0) * math.sqrt(3.0 / rank)
    m0 = jax.random.uniform(keys[7], (batch_size, rank), jnp.float32,
                            -m_bound, m_bound)

    return dict(wih_w=wih_w, wih_b=wih_b, whh_w=whh_w, whh_b=whh_b,
                fc_w=fc_w, fc_b=fc_b, embedding=embedding, m0=m0)


if __name__ == "__main__":
    rank = 8
    vocab_size = 50
    output_size = 4
    batch = 2
    seq_len = 8

    key = jax.random.PRNGKey(0)
    k_params, k_ids = jax.random.split(key)

    params = init_params(k_params, rank, vocab_size, output_size, batch)
    x_ids = jax.random.randint(k_ids, (batch, seq_len), 1, vocab_size, dtype=jnp.int32)
    # zero-pad the tail of the first sequence (padding_idx=0 behaviour)
    x_ids = x_ids.at[0, 5:].set(0)
    lens = jnp.array([5, 8], dtype=jnp.int32)

    out = tn_model_forward(x_ids, lens, params)
    jax.block_until_ready(out)
    assert out.shape == (batch, output_size)
    assert bool(jnp.all(jnp.isfinite(out)))

    ref = tn_model_reference(x_ids, lens, params)
    max_err = float(jnp.max(jnp.abs(out - ref)))
    assert max_err < 1e-2, f"kernel/reference mismatch: {max_err}"

    print("KERNEL_OK")
</pallas_src>

<mosaic_0001>
module attributes {stable_mosaic.version = 11 : i64} {
  func.func @tn_fused_kernel(%arg0: i32, %arg1: memref<1x2x64xf32, #tpu.memory_space<vmem>>, %arg2: memref<2x1xi32, #tpu.memory_space<vmem>>, %arg3: memref<2x8xf32, #tpu.memory_space<vmem>>, %arg4: memref<64x64xf32, #tpu.memory_space<vmem>>, %arg5: memref<1x64xf32, #tpu.memory_space<vmem>>, %arg6: memref<8x64xf32, #tpu.memory_space<vmem>>, %arg7: memref<1x64xf32, #tpu.memory_space<vmem>>, %arg8: memref<64x8xf32, #tpu.memory_space<vmem>>, %arg9: memref<8x4xf32, #tpu.memory_space<vmem>>, %arg10: memref<1x4xf32, #tpu.memory_space<vmem>>, %arg11: memref<2x4xf32, #tpu.memory_space<vmem>>, %arg12: memref<2x8xf32, #tpu.memory_space<vmem>>) attributes {dimension_semantics = [#tpu.dimension_semantics<arbitrary>], iteration_bounds = array<i64: 8>, scalar_prefetch = 0 : i64, scratch_operands = 1 : i64, tpu.core_type = #tpu.core_type<tc>, window_params = [{transform_indices = @transform_0, window_bounds = array<i64: 1, 2, 64>}, {pipeline_mode = #tpu.pipeline_mode<synchronous>, transform_indices = @transform_1, window_bounds = array<i64: 2, 1>}, {pipeline_mode = #tpu.pipeline_mode<synchronous>, transform_indices = @transform_2, window_bounds = array<i64: 2, 8>}, {pipeline_mode = #tpu.pipeline_mode<synchronous>, transform_indices = @transform_3, window_bounds = array<i64: 64, 64>}, {pipeline_mode = #tpu.pipeline_mode<synchronous>, transform_indices = @transform_4, window_bounds = array<i64: 1, 64>}, {pipeline_mode = #tpu.pipeline_mode<synchronous>, transform_indices = @transform_5, window_bounds = array<i64: 8, 64>}, {pipeline_mode = #tpu.pipeline_mode<synchronous>, transform_indices = @transform_6, window_bounds = array<i64: 1, 64>}, {pipeline_mode = #tpu.pipeline_mode<synchronous>, transform_indices = @transform_7, window_bounds = array<i64: 64, 8>}, {pipeline_mode = #tpu.pipeline_mode<synchronous>, transform_indices = @transform_8, window_bounds = array<i64: 8, 4>}, {pipeline_mode = #tpu.pipeline_mode<synchronous>, transform_indices = @transform_9, window_bounds = array<i64: 1, 4>}, {pipeline_mode = #tpu.pipeline_mode<synchronous>, transform_indices = @transform_10, window_bounds = array<i64: 2, 4>}]} {
    %c0_i32 = arith.constant 0 : i32
    %0 = arith.cmpi eq, %arg0, %c0_i32 : i32
    %1 = arith.extui %0 : i1 to i32
    %c0_i32_0 = arith.constant 0 : i32
    %2 = arith.cmpi ne, %1, %c0_i32_0 : i32
    scf.if %2 {
      %c0_22 = arith.constant 0 : index
      %c0_23 = arith.constant 0 : index
      %30 = vector.load %arg3[%c0_22, %c0_23] : memref<2x8xf32, #tpu.memory_space<vmem>>, vector<2x8xf32>
      %c0_24 = arith.constant 0 : index
      %c0_25 = arith.constant 0 : index
      %31 = vector.load %arg12[%c0_24, %c0_25] : memref<2x8xf32, #tpu.memory_space<vmem>>, vector<2x8xf32>
      tpu.vector_store %arg12[%c0_24, %c0_25], %30 {strides = array<i32>} : memref<2x8xf32, #tpu.memory_space<vmem>>, vector<2x8xf32>,
    } else {
    }
    %c0 = arith.constant 0 : index
    %c0_1 = arith.constant 0 : index
    %3 = vector.load %arg12[%c0, %c0_1] : memref<2x8xf32, #tpu.memory_space<vmem>>, vector<2x8xf32>
    %c0_2 = arith.constant 0 : index
    %c0_3 = arith.constant 0 : index
    %c0_4 = arith.constant 0 : index
    %4 = vector.load %arg1[%c0_2, %c0_3, %c0_4] : memref<1x2x64xf32, #tpu.memory_space<vmem>>, vector<1x2x64xf32>
    %5 = vector.shape_cast %4 : vector<1x2x64xf32> to vector<2x64xf32>
    %c0_5 = arith.constant 0 : index
    %c0_6 = arith.constant 0 : index
    %6 = vector.load %arg4[%c0_5, %c0_6] : memref<64x64xf32, #tpu.memory_space<vmem>>, vector<64x64xf32>
    %cst = arith.constant dense<0.000000e+00> : vector<2x64xf32>
    %7 = tpu.matmul %5, %6, %cst {dimension_numbers = #tpu.dot_dimension_numbers<[1], [0], [0], [1], [0, 0, 1, 1], [], []>} : vector<2x64xf32>, vector<64x64xf32>, vector<2x64xf32> -> vector<2x64xf32>
    %c0_7 = arith.constant 0 : index
    %c0_8 = arith.constant 0 : index
    %8 = vector.load %arg5[%c0_7, %c0_8] : memref<1x64xf32, #tpu.memory_space<vmem>>, vector<1x64xf32>
    %9 = vector.broadcast %8 : vector<1x64xf32> to vector<2x64xf32>
    %10 = arith.addf %7, %9 : vector<2x64xf32>
    %c0_9 = arith.constant 0 : index
    %c0_10 = arith.constant 0 : index
    %11 = vector.load %arg6[%c0_9, %c0_10] : memref<8x64xf32, #tpu.memory_space<vmem>>, vector<8x64xf32>
    %cst_11 = arith.constant dense<0.000000e+00> : vector<2x64xf32>
    %12 = tpu.matmul %3, %11, %cst_11 {dimension_numbers = #tpu.dot_dimension_numbers<[1], [0], [0], [1], [0, 0, 1, 1], [], []>} : vector<2x8xf32>, vector<8x64xf32>, vector<2x64xf32> -> vector<2x64xf32>
    %c0_12 = arith.constant 0 : index
    %c0_13 = arith.constant 0 : index
    %13 = vector.load %arg7[%c0_12, %c0_13] : memref<1x64xf32, #tpu.memory_space<vmem>>, vector<1x64xf32>
    %14 = vector.broadcast %13 : vector<1x64xf32> to vector<2x64xf32>
    %15 = arith.addf %12, %14 : vector<2x64xf32>
    %16 = arith.mulf %15, %10 : vector<2x64xf32>
    %c0_14 = arith.constant 0 : index
    %c0_15 = arith.constant 0 : index
    %17 = vector.load %arg8[%c0_14, %c0_15] : memref<64x8xf32, #tpu.memory_space<vmem>>, vector<64x8xf32>
    %cst_16 = arith.constant dense<0.000000e+00> : vector<2x8xf32>
    %18 = tpu.matmul %16, %17, %cst_16 {dimension_numbers = #tpu.dot_dimension_numbers<[1], [0], [0], [1], [0, 0, 1, 1], [], []>} : vector<2x64xf32>, vector<64x8xf32>, vector<2x8xf32> -> vector<2x8xf32>
    %19 = math.tanh %18 : vector<2x8xf32>
    %c0_17 = arith.constant 0 : index
    %c0_18 = arith.constant 0 : index
    %20 = vector.load %arg2[%c0_17, %c0_18] : memref<2x1xi32, #tpu.memory_space<vmem>>, vector<2x1xi32>
    %21 = vector.broadcast %arg0 : i32 to vector<2x1xi32>
    %22 = arith.cmpi slt, %21, %20 : vector<2x1xi32>
    %23 = vector.shape_cast %22 : vector<2x1xi1> to vector<2x1xi1>
    %24 = vector.broadcast %23 : vector<2x1xi1> to vector<2x8xi1>
    %25 = arith.select %24, %19, %3 : vector<2x8xi1>, vector<2x8xf32>
    %c0_19 = arith.constant 0 : index
    %c0_20 = arith.constant 0 : index
    %26 = vector.load %arg12[%c0_19, %c0_20] : memref<2x8xf32, #tpu.memory_space<vmem>>, vector<2x8xf32>
    tpu.vector_store %arg12[%c0_19, %c0_20], %25 {strides = array<i32>} : memref<2x8xf32, #tpu.memory_space<vmem>>, vector<2x8xf32>,
    %c7_i32 = arith.constant 7 : i32
    %27 = arith.cmpi eq, %arg0, %c7_i32 : i32
    %28 = arith.extui %27 : i1 to i32
    %c0_i32_21 = arith.constant 0 : i32
    %29 = arith.cmpi ne, %28, %c0_i32_21 : i32
    scf.if %29 {
      %c0_22 = arith.constant 0 : index
      %c0_23 = arith.constant 0 : index
      %30 = vector.load %arg12[%c0_22, %c0_23] : memref<2x8xf32, #tpu.memory_space<vmem>>, vector<2x8xf32>
      %c0_24 = arith.constant 0 : index
      %c0_25 = arith.constant 0 : index
      %31 = vector.load %arg9[%c0_24, %c0_25] : memref<8x4xf32, #tpu.memory_space<vmem>>, vector<8x4xf32>
      %cst_26 = arith.constant dense<0.000000e+00> : vector<2x4xf32>
      %32 = tpu.matmul %30, %31, %cst_26 {dimension_numbers = #tpu.dot_dimension_numbers<[1], [0], [0], [1], [0, 0, 1, 1], [], []>} : vector<2x8xf32>, vector<8x4xf32>, vector<2x4xf32> -> vector<2x4xf32>
      %c0_27 = arith.constant 0 : index
      %c0_28 = arith.constant 0 : index
      %33 = vector.load %arg10[%c0_27, %c0_28] : memref<1x4xf32, #tpu.memory_space<vmem>>, vector<1x4xf32>
      %34 = vector.broadcast %33 : vector<1x4xf32> to vector<2x4xf32>
      %35 = arith.addf %32, %34 : vector<2x4xf32>
      %c0_29 = arith.constant 0 : index
      %c0_30 = arith.constant 0 : index
      %36 = vector.load %arg11[%c0_29, %c0_30] : memref<2x4xf32, #tpu.memory_space<vmem>>, vector<2x4xf32>
      tpu.vector_store %arg11[%c0_29, %c0_30], %35 {strides = array<i32>} : memref<2x4xf32, #tpu.memory_space<vmem>>, vector<2x4xf32>,
    } else {
    }
    return
  }
  func.func @transform_0(%arg0: i32) -> (i32, i32, i32) {
    %c0_i32 = arith.constant 0 : i32
    %c0_i32_0 = arith.constant 0 : i32
    %c0_i32_1 = arith.constant 0 : i32
    return %arg0, %c0_i32, %c0_i32_0 : i32, i32, i32
  }
  func.func @transform_1(%arg0: i32) -> (i32, i32) {
    %c0_i32 = arith.constant 0 : i32
    %c0_i32_0 = arith.constant 0 : i32
    %c0_i32_1 = arith.constant 0 : i32
    return %c0_i32, %c0_i32_0 : i32, i32
  }
  func.func @transform_2(%arg0: i32) -> (i32, i32) {
    %c0_i32 = arith.constant 0 : i32
    %c0_i32_0 = arith.constant 0 : i32
    %c0_i32_1 = arith.constant 0 : i32
    return %c0_i32, %c0_i32_0 : i32, i32
  }
  func.func @transform_3(%arg0: i32) -> (i32, i32) {
    %c0_i32 = arith.constant 0 : i32
    %c0_i32_0 = arith.constant 0 : i32
    %c0_i32_1 = arith.constant 0 : i32
    return %c0_i32, %c0_i32_0 : i32, i32
  }
  func.func @transform_4(%arg0: i32) -> (i32, i32) {
    %c0_i32 = arith.constant 0 : i32
    %c0_i32_0 = arith.constant 0 : i32
    %c0_i32_1 = arith.constant 0 : i32
    return %c0_i32, %c0_i32_0 : i32, i32
  }
  func.func @transform_5(%arg0: i32) -> (i32, i32) {
    %c0_i32 = arith.constant 0 : i32
    %c0_i32_0 = arith.constant 0 : i32
    %c0_i32_1 = arith.constant 0 : i32
    return %c0_i32, %c0_i32_0 : i32, i32
  }
  func.func @transform_6(%arg0: i32) -> (i32, i32) {
    %c0_i32 = arith.constant 0 : i32
    %c0_i32_0 = arith.constant 0 : i32
    %c0_i32_1 = arith.constant 0 : i32
    return %c0_i32, %c0_i32_0 : i32, i32
  }
  func.func @transform_7(%arg0: i32) -> (i32, i32) {
    %c0_i32 = arith.constant 0 : i32
    %c0_i32_0 = arith.constant 0 : i32
    %c0_i32_1 = arith.constant 0 : i32
    return %c0_i32, %c0_i32_0 : i32, i32
  }
  func.func @transform_8(%arg0: i32) -> (i32, i32) {
    %c0_i32 = arith.constant 0 : i32
    %c0_i32_0 = arith.constant 0 : i32
    %c0_i32_1 = arith.constant 0 : i32
    return %c0_i32, %c0_i32_0 : i32, i32
  }
  func.func @transform_9(%arg0: i32) -> (i32, i32) {
    %c0_i32 = arith.constant 0 : i32
    %c0_i32_0 = arith.constant 0 : i32
    %c0_i32_1 = arith.constant 0 : i32
    return %c0_i32, %c0_i32_0 : i32, i32
  }
  func.func @transform_10(%arg0: i32) -> (i32, i32) {
    %c0_i32 = arith.constant 0 : i32
    %c0_i32_0 = arith.constant 0 : i32
    %c0_i32_1 = arith.constant 0 : i32
    return %c0_i32, %c0_i32_0 : i32, i32
  }
}

</mosaic_0001>

<llo_original>
// kernel: tpu_custom_call.1
$region0: #{tpu_custom_call.1}
  #allocation0 [shape = 'u32[]', space=smem, size = 0x4, offset = 0x4, fixed_abs, tag = 'smem constant byte address 0x4 - core index']
  #allocation1 [shape = 'u32[72,128]{1,0:T(1,128)}', space=vmem, size = 0x9000, scoped, tag = 'internal scratch']
  #allocation2 [shape = 'f32[2,8]{1,0:T(2,128)}', space=vmem, size = 0x400, scoped, tag = 'scratch operand']
  %s0 = inlined_call_operand.hbm [shape: f32[8,2,64], index: 0, kind: input, shape index: {}]
  %s1 = inlined_call_operand.vmem [shape: s32[2,1], index: 1, kind: input, shape index: {}]
  %s2 = inlined_call_operand.vmem [shape: f32[2,8], index: 2, kind: input, shape index: {}]
  %s3 = inlined_call_operand.vmem [shape: f32[64,64], index: 3, kind: input, shape index: {}]
  %s4 = inlined_call_operand.vmem [shape: f32[1,64], index: 4, kind: input, shape index: {}]
  %s5 = inlined_call_operand.vmem [shape: f32[8,64], index: 5, kind: input, shape index: {}]
  %s6 = inlined_call_operand.vmem [shape: f32[1,64], index: 6, kind: input, shape index: {}]
  %s7 = inlined_call_operand.vmem [shape: f32[64,8], index: 7, kind: input, shape index: {}]
  %s8 = inlined_call_operand.vmem [shape: f32[8,4], index: 8, kind: input, shape index: {}]
  %s9 = inlined_call_operand.vmem [shape: f32[1,4], index: 9, kind: input, shape index: {}]
  %s10 = inlined_call_operand.hbm [shape: f32[2,4], index: 10, kind: output, shape index: {}]
  %s11 = sld [smem:[#allocation0]]
  $region85: #{tpu_custom_call.1} parent=0
    _
  %s13 = ssub.s32 1, %s11
  %s14 = scalar_select 0, %s13, %s11
  $region1: #{tpu_custom_call.1} parent=0
    #allocation3 [shape = 'u8[2048]{0}', space=vmem, size = 0x800, scoped, tag = 'input window, operand 0']
    #allocation4 [shape = 's32[2]{0}', space=sflag, size = 0x8, scoped, tag = 'scoped memory for tpu_custom_call.1']
    #allocation5 [shape = 's32[2]{0}', space=sflag, size = 0x8, scoped, tag = 'scoped memory for tpu_custom_call.1']
    #allocation6 [shape = 'u8[1024]{0}', space=vmem, size = 0x400, scoped, tag = 'output window, operand 0, single buffered']
    %15 = vsyncpa [#allocation4], 0
    %s16 = scalar_lea.sflag [#allocation4], 1
    %17 = vsyncpa %s16, 0
    %18 = vsyncpa [#allocation5], 0
    loop: start=0, step=1, limit=10
    $region2: #{tpu_custom_call.1} parent=1 // loop_pre_header
      _
    $region3: #{tpu_custom_call.1} parent=1 // loop_header
      %s20 = sphi 0, %s24
      %p21 = scmp.ge.s32.totalorder %s20, 10
      %s30 = sphi 0, %s32
      %s33 = sphi 0, %s30
      %s34 = sphi 0, %s33
      %s50 = sphi 0, %s34
      %s54 = sphi 0, %s54
      %s56 = sphi 0, %s54
      %s57 = sphi 0, %s56
      %s71 = sphi 0, %s57
      %s75 = sphi 0, %s75
      %s77 = sphi 0, %s75
      %s78 = sphi 0, %s77
      %s92 = sphi 0, %s78
      %s96 = sphi 0, %s96
      %s98 = sphi 0, %s96
      %s99 = sphi 0, %s98
      %s113 = sphi 0, %s99
      %s117 = sphi 0, %s117
      %s119 = sphi 0, %s117
      %s120 = sphi 0, %s119
      %s134 = sphi 0, %s120
      %s138 = sphi 0, %s138
      %s140 = sphi 0, %s138
      %s141 = sphi 0, %s140
      %s155 = sphi 0, %s141
      %s159 = sphi 0, %s159
      %s161 = sphi 0, %s159
      %s162 = sphi 0, %s161
      %s176 = sphi 0, %s162
      %s180 = sphi 0, %s180
      %s182 = sphi 0, %s180
      %s183 = sphi 0, %s182
      %s197 = sphi 0, %s183
      %s201 = sphi 0, %s201
      %s203 = sphi 0, %s201
      %s204 = sphi 0, %s203
      %s218 = sphi 0, %s204
      %s222 = sphi 0, %s222
      %s224 = sphi 0, %s222
      %s225 = sphi 0, %s224
      %s239 = sphi 0, %s225
      %s243 = sphi 0, %s243
      %s245 = sphi 0, %s243
      %s246 = sphi 0, %s245
      %s260 = sphi 0, %s246
    $region4: #{tpu_custom_call.1} parent=1 // loop_header_branch
      %23 = sbr.rel (%p21) target = $region8
    $region5: #{tpu_custom_call.1} parent=1 // loop_body
      %s25 = ssub.s32 %s20, 1
      %s26 = ssub.s32 %s20, 2
      %s27 = sadd.s32 %s20, 1
      %s28 = ssub.s32 %s20, %s27
      %p29 = scmp.eq.s32.totalorder %s28, 0
      %s31 = sadd.s32 %s30, 1
      %s32 = scalar_select %p29, %s30, %s31
      %p35 = pneg %p29
      %p36 = scmp.eq.s32.totalorder %s20, 7
      %p37 = por %p35, %p36
      %p38 = scmp.ne.s32.totalorder %s30, %s33
      %p39 = scmp.eq.s32.totalorder %s20, 0
      %p40 = por %p38, %p39
      %p41 = scmp.ne.s32.totalorder %s30, %s33
      %p42 = scmp.eq.s32.totalorder %s25, 7
      %p43 = por %p41, %p42
      %p44 = scmp.ne.s32.totalorder %s33, %s34
      %p45 = scmp.eq.s32.totalorder %s25, 0
      %p46 = por %p44, %p45
      %p47 = scmp.ne.s32.totalorder %s33, %s34
      %p48 = scmp.eq.s32.totalorder %s26, 7
      %p49 = por %p47, %p48
      %p51 = scmp.ne.s32.totalorder %s34, %s50
      %p52 = scmp.eq.s32.totalorder %s26, 0
      %p53 = por %p51, %p52
      %s55 = sadd.s32 %s54, 1
      %p58 = scmp.eq.s32.totalorder %s20, 7
      %p59 = scmp.ne.s32.totalorder %s54, %s56
      %p60 = scmp.eq.s32.totalorder %s20, 0
      %p61 = por %p59, %p60
      %p62 = scmp.ne.s32.totalorder %s54, %s56
      %p63 = scmp.eq.s32.totalorder %s25, 7
      %p64 = por %p62, %p63
      %p65 = scmp.ne.s32.totalorder %s56, %s57
      %p66 = scmp.eq.s32.totalorder %s25, 0
      %p67 = por %p65, %p66
      %p68 = scmp.ne.s32.totalorder %s56, %s57
      %p69 = scmp.eq.s32.totalorder %s26, 7
      %p70 = por %p68, %p69
      %p72 = scmp.ne.s32.totalorder %s57, %s71
      %p73 = scmp.eq.s32.totalorder %s26, 0
      %p74 = por %p72, %p73
      %s76 = sadd.s32 %s75, 1
      %p79 = scmp.eq.s32.totalorder %s20, 7
      %p80 = scmp.ne.s32.totalorder %s75, %s77
      %p81 = scmp.eq.s32.totalorder %s20, 0
      %p82 = por %p80, %p81
      %p83 = scmp.ne.s32.totalorder %s75, %s77
      %p84 = scmp.eq.s32.totalorder %s25, 7
      %p85 = por %p83, %p84
      %p86 = scmp.ne.s32.totalorder %s77, %s78
      %p87 = scmp.eq.s32.totalorder %s25, 0
      %p88 = por %p86, %p87
      %p89 = scmp.ne.s32.totalorder %s77, %s78
      %p90 = scmp.eq.s32.totalorder %s26, 7
      %p91 = por %p89, %p90
      %p93 = scmp.ne.s32.totalorder %s78, %s92
      %p94 = scmp.eq.s32.totalorder %s26, 0
      %p95 = por %p93, %p94
      %s97 = sadd.s32 %s96, 1
      %p100 = scmp.eq.s32.totalorder %s20, 7
      %p101 = scmp.ne.s32.totalorder %s96, %s98
      %p102 = scmp.eq.s32.totalorder %s20, 0
      %p103 = por %p101, %p102
      %p104 = scmp.ne.s32.totalorder %s96, %s98
      %p105 = scmp.eq.s32.totalorder %s25, 7
      %p106 = por %p104, %p105
      %p107 = scmp.ne.s32.totalorder %s98, %s99
      %p108 = scmp.eq.s32.totalorder %s25, 0
      %p109 = por %p107, %p108
      %p110 = scmp.ne.s32.totalorder %s98, %s99
      %p111 = scmp.eq.s32.totalorder %s26, 7
      %p112 = por %p110, %p111
      %p114 = scmp.ne.s32.totalorder %s99, %s113
      %p115 = scmp.eq.s32.totalorder %s26, 0
      %p116 = por %p114, %p115
      %s118 = sadd.s32 %s117, 1
      %p121 = scmp.eq.s32.totalorder %s20, 7
      %p122 = scmp.ne.s32.totalorder %s117, %s119
      %p123 = scmp.eq.s32.totalorder %s20, 0
      %p124 = por %p122, %p123
      %p125 = scmp.ne.s32.totalorder %s117, %s119
      %p126 = scmp.eq.s32.totalorder %s25, 7
      %p127 = por %p125, %p126
      %p128 = scmp.ne.s32.totalorder %s119, %s120
      %p129 = scmp.eq.s32.totalorder %s25, 0
      %p130 = por %p128, %p129
      %p131 = scmp.ne.s32.totalorder %s119, %s120
      %p132 = scmp.eq.s32.totalorder %s26, 7
      %p133 = por %p131, %p132
      %p135 = scmp.ne.s32.totalorder %s120, %s134
      %p136 = scmp.eq.s32.totalorder %s26, 0
      %p137 = por %p135, %p136
      %s139 = sadd.s32 %s138, 1
      %p142 = scmp.eq.s32.totalorder %s20, 7
      %p143 = scmp.ne.s32.totalorder %s138, %s140
      %p144 = scmp.eq.s32.totalorder %s20, 0
      %p145 = por %p143, %p144
      %p146 = scmp.ne.s32.totalorder %s138, %s140
      %p147 = scmp.eq.s32.totalorder %s25, 7
      %p148 = por %p146, %p147
      %p149 = scmp.ne.s32.totalorder %s140, %s141
      %p150 = scmp.eq.s32.totalorder %s25, 0
      %p151 = por %p149, %p150
      %p152 = scmp.ne.s32.totalorder %s140, %s141
      %p153 = scmp.eq.s32.totalorder %s26, 7
      %p154 = por %p152, %p153
      %p156 = scmp.ne.s32.totalorder %s141, %s155
      %p157 = scmp.eq.s32.totalorder %s26, 0
      %p158 = por %p156, %p157
      %s160 = sadd.s32 %s159, 1
      %p163 = scmp.eq.s32.totalorder %s20, 7
      %p164 = scmp.ne.s32.totalorder %s159, %s161
      %p165 = scmp.eq.s32.totalorder %s20, 0
      %p166 = por %p164, %p165
      %p167 = scmp.ne.s32.totalorder %s159, %s161
      %p168 = scmp.eq.s32.totalorder %s25, 7
      %p169 = por %p167, %p168
      %p170 = scmp.ne.s32.totalorder %s161, %s162
      %p171 = scmp.eq.s32.totalorder %s25, 0
      %p172 = por %p170, %p171
      %p173 = scmp.ne.s32.totalorder %s161, %s162
      %p174 = scmp.eq.s32.totalorder %s26, 7
      %p175 = por %p173, %p174
      %p177 = scmp.ne.s32.totalorder %s162, %s176
      %p178 = scmp.eq.s32.totalorder %s26, 0
      %p179 = por %p177, %p178
      %s181 = sadd.s32 %s180, 1
      %p184 = scmp.eq.s32.totalorder %s20, 7
      %p185 = scmp.ne.s32.totalorder %s180, %s182
      %p186 = scmp.eq.s32.totalorder %s20, 0
      %p187 = por %p185, %p186
      %p188 = scmp.ne.s32.totalorder %s180, %s182
      %p189 = scmp.eq.s32.totalorder %s25, 7
      %p190 = por %p188, %p189
      %p191 = scmp.ne.s32.totalorder %s182, %s183
      %p192 = scmp.eq.s32.totalorder %s25, 0
      %p193 = por %p191, %p192
      %p194 = scmp.ne.s32.totalorder %s182, %s183
      %p195 = scmp.eq.s32.totalorder %s26, 7
      %p196 = por %p194, %p195
      %p198 = scmp.ne.s32.totalorder %s183, %s197
      %p199 = scmp.eq.s32.totalorder %s26, 0
      %p200 = por %p198, %p199
      %s202 = sadd.s32 %s201, 1
      %p205 = scmp.eq.s32.totalorder %s20, 7
      %p206 = scmp.ne.s32.totalorder %s201, %s203
      %p207 = scmp.eq.s32.totalorder %s20, 0
      %p208 = por %p206, %p207
      %p209 = scmp.ne.s32.totalorder %s201, %s203
      %p210 = scmp.eq.s32.totalorder %s25, 7
      %p211 = por %p209, %p210
      %p212 = scmp.ne.s32.totalorder %s203, %s204
      %p213 = scmp.eq.s32.totalorder %s25, 0
      %p214 = por %p212, %p213
      %p215 = scmp.ne.s32.totalorder %s203, %s204
      %p216 = scmp.eq.s32.totalorder %s26, 7
      %p217 = por %p215, %p216
      %p219 = scmp.ne.s32.totalorder %s204, %s218
      %p220 = scmp.eq.s32.totalorder %s26, 0
      %p221 = por %p219, %p220
      %s223 = sadd.s32 %s222, 1
      %p226 = scmp.eq.s32.totalorder %s20, 7
      %p227 = scmp.ne.s32.totalorder %s222, %s224
      %p228 = scmp.eq.s32.totalorder %s20, 0
      %p229 = por %p227, %p228
      %p230 = scmp.ne.s32.totalorder %s222, %s224
      %p231 = scmp.eq.s32.totalorder %s25, 7
      %p232 = por %p230, %p231
      %p233 = scmp.ne.s32.totalorder %s224, %s225
      %p234 = scmp.eq.s32.totalorder %s25, 0
      %p235 = por %p233, %p234
      %p236 = scmp.ne.s32.totalorder %s224, %s225
      %p237 = scmp.eq.s32.totalorder %s26, 7
      %p238 = por %p236, %p237
      %p240 = scmp.ne.s32.totalorder %s225, %s239
      %p241 = scmp.eq.s32.totalorder %s26, 0
      %p242 = por %p240, %p241
      %s244 = sadd.s32 %s243, 1
      %p247 = scmp.eq.s32.totalorder %s20, 7
      %p248 = scmp.ne.s32.totalorder %s243, %s245
      %p249 = scmp.eq.s32.totalorder %s20, 0
      %p250 = por %p248, %p249
      %p251 = scmp.ne.s32.totalorder %s243, %s245
      %p252 = scmp.eq.s32.totalorder %s25, 7
      %p253 = por %p251, %p252
      %p254 = scmp.ne.s32.totalorder %s245, %s246
      %p255 = scmp.eq.s32.totalorder %s25, 0
      %p256 = por %p254, %p255
      %p257 = scmp.ne.s32.totalorder %s245, %s246
      %p258 = scmp.eq.s32.totalorder %s26, 7
      %p259 = por %p257, %p258
      %p261 = scmp.ne.s32.totalorder %s246, %s260
      %p262 = scmp.eq.s32.totalorder %s26, 0
      %p263 = por %p261, %p262
      %p264 = scmp.le.s32.totalorder 1, %s20
      %p265 = scmp.lt.s32.totalorder %s20, 9
      %p266 = pnand %p264, %p265
      %p267 = pneg %p266
      // Predicated region
      $region9: #{tpu_custom_call.1} parent=5 // pred_check
        _
      $region10: #{tpu_custom_call.1} parent=5 // pred_check_branch
        %269 = sbr.rel (%p266) target = $region12
      $region11: #{tpu_custom_call.1} parent=5 // pred_region
        %s270 = ssub.s32 %s20, 1
        // Predicated region
        $region13: #{tpu_custom_call.1} parent=11 // pred_check
          %p271 = pneg %p67
        $region14: #{tpu_custom_call.1} parent=11 // pred_check_branch
          %273 = sbr.rel (%p271) target = $region16
        $region15: #{tpu_custom_call.1} parent=11 // pred_region
          _
        $region16: #{tpu_custom_call.1} parent=11 // pred_fallthru
          _
        // Predicated region
        $region17: #{tpu_custom_call.1} parent=11 // pred_check
          %p274 = pneg %p88
        $region18: #{tpu_custom_call.1} parent=11 // pred_check_branch
          %276 = sbr.rel (%p274) target = $region20
        $region19: #{tpu_custom_call.1} parent=11 // pred_region
          _
        $region20: #{tpu_custom_call.1} parent=11 // pred_fallthru
          _
        // Predicated region
        $region21: #{tpu_custom_call.1} parent=11 // pred_check
          %p277 = pneg %p109
        $region22: #{tpu_custom_call.1} parent=11 // pred_check_branch
          %279 = sbr.rel (%p277) target = $region24
        $region23: #{tpu_custom_call.1} parent=11 // pred_region
          _
        $region24: #{tpu_custom_call.1} parent=11 // pred_fallthru
          _
        // Predicated region
        $region25: #{tpu_custom_call.1} parent=11 // pred_check
          %p280 = pneg %p130
        $region26: #{tpu_custom_call.1} parent=11 // pred_check_branch
          %282 = sbr.rel (%p280) target = $region28
        $region27: #{tpu_custom_call.1} parent=11 // pred_region
          _
        $region28: #{tpu_custom_call.1} parent=11 // pred_fallthru
          _
        // Predicated region
        $region29: #{tpu_custom_call.1} parent=11 // pred_check
          %p283 = pneg %p151
        $region30: #{tpu_custom_call.1} parent=11 // pred_check_branch
          %285 = sbr.rel (%p283) target = $region32
        $region31: #{tpu_custom_call.1} parent=11 // pred_region
          _
        $region32: #{tpu_custom_call.1} parent=11 // pred_fallthru
          _
        // Predicated region
        $region33: #{tpu_custom_call.1} parent=11 // pred_check
          %p286 = pneg %p172
        $region34: #{tpu_custom_call.1} parent=11 // pred_check_branch
          %288 = sbr.rel (%p286) target = $region36
        $region35: #{tpu_custom_call.1} parent=11 // pred_region
          _
        $region36: #{tpu_custom_call.1} parent=11 // pred_fallthru
          _
        // Predicated region
        $region37: #{tpu_custom_call.1} parent=11 // pred_check
          %p289 = pneg %p193
        $region38: #{tpu_custom_call.1} parent=11 // pred_check_branch
          %291 = sbr.rel (%p289) target = $region40
        $region39: #{tpu_custom_call.1} parent=11 // pred_region
          _
        $region40: #{tpu_custom_call.1} parent=11 // pred_fallthru
          _
        // Predicated region
        $region41: #{tpu_custom_call.1} parent=11 // pred_check
          %p292 = pneg %p214
        $region42: #{tpu_custom_call.1} parent=11 // pred_check_branch
          %294 = sbr.rel (%p292) target = $region44
        $region43: #{tpu_custom_call.1} parent=11 // pred_region
          _
        $region44: #{tpu_custom_call.1} parent=11 // pred_fallthru
          _
        // Predicated region
        $region45: #{tpu_custom_call.1} parent=11 // pred_check
          %p295 = pneg %p235
        $region46: #{tpu_custom_call.1} parent=11 // pred_check_branch
          %297 = sbr.rel (%p295) target = $region48
        $region47: #{tpu_custom_call.1} parent=11 // pred_region
          _
        $region48: #{tpu_custom_call.1} parent=11 // pred_fallthru
          _
      $region12: #{tpu_custom_call.1} parent=5 // pred_fallthru
        _
      %p298 = scmp.lt.s32.totalorder %s20, 8
      // Predicated region
      $region49: #{tpu_custom_call.1} parent=5 // pred_check
        %p299 = pneg %p298
      $region50: #{tpu_custom_call.1} parent=5 // pred_check_branch
        %301 = sbr.rel (%p299) target = $region52
      $region51: #{tpu_custom_call.1} parent=5 // pred_region
        // Predicated region
        $region53: #{tpu_custom_call.1} parent=51 // pred_check
          %p302 = pneg %p40
        $region54: #{tpu_custom_call.1} parent=51 // pred_check_branch
          %304 = sbr.rel (%p302) target = $region56
        $region55: #{tpu_custom_call.1} parent=51 // pred_region
          %s305 = sand.u32 %s30, 1
          %s306 = scalar_lea.sflag [#allocation4], %s305
          %s307 = sand.u32 %s30, 1
          %s308 = smul.addr %s307, 2
          %s309 = scalar_lea.vmem [#allocation3], %s308
          %311 = vsyncadd %s306, 0
          %s312 = smul.addr %s20, 2
          %s313 = scalar_lea.hbm %s0, %s312
          %s315 = sshll.u32 %s313, 4
          %s316 = int_to_ptr.hbm [resolvable:$true] %s315
          %s317 = sshll.u32 %s309, 4
          %s318 = int_to_ptr.vmem [resolvable:$true] %s317
          %320 = dma.hbm_to_vmem [thread:$0]  %s316, 32, %s318, %s306
        $region56: #{tpu_custom_call.1} parent=51 // pred_fallthru
          _
      $region52: #{tpu_custom_call.1} parent=5 // pred_fallthru
        _
      %p321 = scmp.le.s32.totalorder 1, %s20
      %p322 = scmp.lt.s32.totalorder %s20, 9
      %p323 = pnand %p321, %p322
      %p324 = pneg %p323
      // Predicated region
      $region57: #{tpu_custom_call.1} parent=5 // pred_check
        _
      $region58: #{tpu_custom_call.1} parent=5 // pred_check_branch
        %326 = sbr.rel (%p323) target = $region60
      $region59: #{tpu_custom_call.1} parent=5 // pred_region
        %s327 = ssub.s32 %s20, 1
        %s328 = sand.u32 %s33, 1
        %s329 = scalar_lea.sflag [#allocation4], %s328
        %s330 = sand.u32 %s33, 1
        %s331 = smul.addr %s330, 2
        %s332 = scalar_lea.vmem [#allocation3], %s331
        // Predicated region
        $region61: #{tpu_custom_call.1} parent=59 // pred_check
          %p333 = pneg %p46
        $region62: #{tpu_custom_call.1} parent=59 // pred_check_branch
          %335 = sbr.rel (%p333) target = $region64
        $region63: #{tpu_custom_call.1} parent=59 // pred_region
          %337 = dma.done %s329, 32
        $region64: #{tpu_custom_call.1} parent=59 // pred_fallthru
          _
        %s338 = sand.u32 %s33, 1
        %s339 = scalar_lea.sflag [#allocation4], %s338
        %s340 = sand.u32 %s33, 1
        %s341 = smul.addr %s340, 2
        %s342 = scalar_lea.vmem [#allocation3], %s341
        %p343 = pneg %p46
        %p344 = pneg %p43
        %p345 = pneg %p67
        %p346 = pneg %p64
        %p347 = pneg %p88
        %p348 = pneg %p85
        %p349 = pneg %p109
        %p350 = pneg %p106
        %p351 = pneg %p130
        %p352 = pneg %p127
        %p353 = pneg %p151
        %p354 = pneg %p148
        %p355 = pneg %p172
        %p356 = pneg %p169
        %p357 = pneg %p193
        %p358 = pneg %p190
        %p359 = pneg %p214
        %p360 = pneg %p211
        %p361 = pneg %p235
        %p362 = pneg %p232
        %p363 = pneg %p256
        %p364 = pneg %p253
        %p365 = scmp.eq.s32.totalorder %s25, 0
        // Predicated region
        $region65: #{tpu_custom_call.1} parent=59 // pred_check
          %p366 = pneg %p365
        $region66: #{tpu_custom_call.1} parent=59 // pred_check_branch
          %368 = sbr.rel (%p366) target = $region68
        $region67: #{tpu_custom_call.1} parent=59 // pred_region
          %v369 = vld [vmem:[%s2] sm:$0x3]
          %vm370 = vcmask 58368
          %371 = vst.msk [vmem:[#allocation2] sm:$0x3] %vm370, %v369
        $region68: #{tpu_custom_call.1} parent=59 // pred_fallthru
          _
        %v372 = vld [vmem:[#allocation2] sm:$0x3]
        %v373 = vld [vmem:[%s332] sm:$0x3]
        %v374 = vld [vmem:[%s3] sm:$0xff]
        %v375 = vld [vmem:[%s3 + $0x8] sm:$0xff]
        %v376 = vld [vmem:[%s3 + $0x10] sm:$0xff]
        %v377 = vld [vmem:[%s3 + $0x18] sm:$0xff]
        %v378 = vld [vmem:[%s3 + $0x20] sm:$0xff]
        %v379 = vld [vmem:[%s3 + $0x28] sm:$0xff]
        %v380 = vld [vmem:[%s3 + $0x30] sm:$0xff]
        %v381 = vld [vmem:[%s3 + $0x38] sm:$0xff]
        %v382 = vld [vmem:[%s4] sm:$0x1]
        %v384 = vperm.slane %v382, 0
        %vm386 = vcmask 523264
        %v388 = vsel %vm386, %v373, 0
        %390 = vmatpush.msra.mxu0 0.0
        %391 = vmatpush.msra.mxu0 0.0
        %392 = vmatpush.msra.mxu0 0.0
        %393 = vmatpush.msra.mxu0 0.0
        %394 = vmatpush.msra.mxu0 0.0
        %395 = vmatpush.msra.mxu0 0.0
        %396 = vmatpush.msra.mxu0 0.0
        %397 = vmatpush.msra.mxu0 0.0
        %398 = vmatpush.msra.mxu0 %v381
        %399 = vmatpush.msra.mxu0 %v380
        %400 = vmatpush.msra.mxu0 %v379
        %401 = vmatpush.msra.mxu0 %v378
        %402 = vmatpush.msra.mxu0 %v377
        %403 = vmatpush.msra.mxu0 %v376
        %404 = vmatpush.msra.mxu0 %v375
        %405 = vmatpush.msra.mxu0 %v374
        %406 = vmatmul.f32.gmra.mxu0 %v388
        %v407 = vpop.f32.mrf.mxu0
        %v408 = vadd.f32 %v384, %v407
        %409 = vdwg.mxu0
        %v410 = vld [vmem:[%s5] sm:$0xff]
        %v411 = vld [vmem:[%s6] sm:$0x1]
        %v413 = vperm.slane %v411, 0
        %vm415 = vcmask 64512
        %v417 = vsel %vm415, %v372, 0
        %419 = vmatpush.msra.mxu0 0.0
        %420 = vmatpush.msra.mxu0 0.0
        %421 = vmatpush.msra.mxu0 0.0
        %422 = vmatpush.msra.mxu0 0.0
        %423 = vmatpush.msra.mxu0 0.0
        %424 = vmatpush.msra.mxu0 0.0
        %425 = vmatpush.msra.mxu0 0.0
        %426 = vmatpush.msra.mxu0 0.0
        %427 = vmatpush.msra.mxu0 0.0
        %428 = vmatpush.msra.mxu0 0.0
        %429 = vmatpush.msra.mxu0 0.0
        %430 = vmatpush.msra.mxu0 0.0
        %431 = vmatpush.msra.mxu0 0.0
        %432 = vmatpush.msra.mxu0 0.0
        %433 = vmatpush.msra.mxu0 0.0
        %434 = vmatpush.msra.mxu0 %v410
        %435 = vmatmul.f32.gmra.mxu0 %v417
        %v436 = vpop.f32.mrf.mxu0
        %v437 = vadd.f32 %v413, %v436
        %438 = vdwg.mxu0
        %v439 = vmul.f32 %v437, %v408
        %v440 = vld [vmem:[%s7] sm:$0xff]
        %v441 = vld [vmem:[%s7 + $0x8] sm:$0xff]
        %v442 = vld [vmem:[%s7 + $0x10] sm:$0xff]
        %v443 = vld [vmem:[%s7 + $0x18] sm:$0xff]
        %v444 = vld [vmem:[%s7 + $0x20] sm:$0xff]
        %v445 = vld [vmem:[%s7 + $0x28] sm:$0xff]
        %v446 = vld [vmem:[%s7 + $0x30] sm:$0xff]
        %v447 = vld [vmem:[%s7 + $0x38] sm:$0xff]
        %v449 = vsel %vm386, %v439, 0
        %451 = vmatpush.msra.mxu0 0.0
        %452 = vmatpush.msra.mxu0 0.0
        %453 = vmatpush.msra.mxu0 0.0
        %454 = vmatpush.msra.mxu0 0.0
        %455 = vmatpush.msra.mxu0 0.0
        %456 = vmatpush.msra.mxu0 0.0
        %457 = vmatpush.msra.mxu0 0.0
        %458 = vmatpush.msra.mxu0 0.0
        %459 = vmatpush.msra.mxu0 %v447
        %460 = vmatpush.msra.mxu0 %v446
        %461 = vmatpush.msra.mxu0 %v445
        %462 = vmatpush.msra.mxu0 %v444
        %463 = vmatpush.msra.mxu0 %v443
        %464 = vmatpush.msra.mxu0 %v442
        %465 = vmatpush.msra.mxu0 %v441
        %466 = vmatpush.msra.mxu0 %v440
        %467 = vmatmul.f32.gmra.mxu0 %v449
        %v468 = vpop.f32.mrf.mxu0
        %v469 = vadd.f32 0.0, %v468
        %470 = vdwg.mxu0
        %v471 = vtanh.pop %v469
        %v472 = vld [vmem:[%s1] sm:$0x3]
        %v473 = vstv %s25
        %vm474 = vcmp.lt.s32.totalorder %v473, %v472
        %v475 = vsel %vm474, 1, 0
        %476 = vset.pattern.permute.xlu0 0
        %477 = vperm.xlu0 %476, %v475
        %v478 = vpop.permute.xlu0 %477
        %vm479 = vcmp.eq.s32.totalorder %v478, 1
        %v480 = vsel %vm479, %v471, %v372
        %vm481 = vcmask 58368
        %482 = vst.msk [vmem:[#allocation2] sm:$0x3] %vm481, %v480
        %p483 = scmp.eq.s32.totalorder %s25, 7
        // Predicated region
        $region69: #{tpu_custom_call.1} parent=59 // pred_check
          %p484 = pneg %p483
        $region70: #{tpu_custom_call.1} parent=59 // pred_check_branch
          %486 = sbr.rel (%p484) target = $region72
        $region71: #{tpu_custom_call.1} parent=59 // pred_region
          %v487 = vld [vmem:[#allocation2] sm:$0x3]
          %v488 = vld [vmem:[%s8] sm:$0xff]
          %v489 = vld [vmem:[%s9] sm:$0x1]
          %v491 = vperm.slane %v489, 0
          %v494 = vsel %vm415, %v487, 0
          %496 = vmatpush.msra.mxu0 0.0
          %497 = vmatpush.msra.mxu0 0.0
          %498 = vmatpush.msra.mxu0 0.0
          %499 = vmatpush.msra.mxu0 0.0
          %500 = vmatpush.msra.mxu0 0.0
          %501 = vmatpush.msra.mxu0 0.0
          %502 = vmatpush.msra.mxu0 0.0
          %503 = vmatpush.msra.mxu0 0.0
          %504 = vmatpush.msra.mxu0 0.0
          %505 = vmatpush.msra.mxu0 0.0
          %506 = vmatpush.msra.mxu0 0.0
          %507 = vmatpush.msra.mxu0 0.0
          %508 = vmatpush.msra.mxu0 0.0
          %509 = vmatpush.msra.mxu0 0.0
          %510 = vmatpush.msra.mxu0 0.0
          %511 = vmatpush.msra.mxu0 %v488
          %512 = vmatmul.f32.gmra.mxu0 %v494
          %v513 = vpop.f32.mrf.mxu0
          %v514 = vadd.f32 %v491, %v513
          %515 = vdwg.mxu0
          %vm516 = vcmask 25600
          %517 = vst.msk [vmem:[#allocation6] sm:$0x3] %vm516, %v514
        $region72: #{tpu_custom_call.1} parent=59 // pred_fallthru
          _
        // Predicated region
        $region73: #{tpu_custom_call.1} parent=59 // pred_check
          %p518 = pneg %p253
        $region74: #{tpu_custom_call.1} parent=59 // pred_check_branch
          %520 = sbr.rel (%p518) target = $region76
        $region75: #{tpu_custom_call.1} parent=59 // pred_region
          %522 = vsyncadd [#allocation5], 0
          %s524 = sshll.u32 [#allocation6], 4
          %s525 = int_to_ptr.vmem [resolvable:$true] %s524
          %s526 = sshll.u32 %s10, 4
          %s527 = int_to_ptr.hbm [resolvable:$true] %s526
          %529 = dma.vmem_to_hbm [thread:$0]  %s525, 32, %s527, [#allocation5]
        $region76: #{tpu_custom_call.1} parent=59 // pred_fallthru
          _
        // Predicated region
        $region77: #{tpu_custom_call.1} parent=59 // pred_check
          %p530 = pneg %p253
        $region78: #{tpu_custom_call.1} parent=59 // pred_check_branch
          %532 = sbr.rel (%p530) target = $region80
        $region79: #{tpu_custom_call.1} parent=59 // pred_region
          %534 = dma.done [#allocation5], 32
        $region80: #{tpu_custom_call.1} parent=59 // pred_fallthru
          _
      $region60: #{tpu_custom_call.1} parent=5 // pred_fallthru
        _
      %p535 = scmp.le.s32.totalorder 2, %s20
      // Predicated region
      $region81: #{tpu_custom_call.1} parent=5 // pred_check
        %p536 = pneg %p535
      $region82: #{tpu_custom_call.1} parent=5 // pred_check_branch
        %538 = sbr.rel (%p536) target = $region84
      $region83: #{tpu_custom_call.1} parent=5 // pred_region
        %s539 = ssub.s32 %s20, 2
      $region84: #{tpu_custom_call.1} parent=5 // pred_fallthru
        _
    $region6: #{tpu_custom_call.1} parent=1 // loop_footer
      %s24 = sadd.s32 1, %s20
    $region7: #{tpu_custom_call.1} parent=1 // loop_footer_branch
      %19 = sbr.rel target = $region3
    $region8: #{tpu_custom_call.1} parent=1 // loop_exit
      _
    %540 = vsyncpa [#allocation4], 1
    %s541 = scalar_lea.sflag [#allocation4], 1
    %542 = vsyncpa %s541, 1
    %543 = vsyncpa [#allocation5], 1
    %s544 = scalar_lea.sflag [#allocation5], 1
    %545 = vsyncpa %s544, 1

</llo_original>
